<compile_context>
chip_gen: v7x
topology: tpu7x:2x2x1
jax: 0.10.0
libtpu: 0.0.40
codegen_flags: <defaults>
</compile_context>

<pallas_src>
import jax
import jax.numpy as jnp
from jax.experimental import pallas as pl
from jax.experimental.pallas import tpu as pltpu


def _conv1x1_pad_unary_kernel(x_ref, w_ref, b_ref, o_ref):
    """x_ref: (N, Cin, H, W) VMEM f32   w_ref: (Cout, Cin) SMEM
       b_ref: (Cout,) SMEM              o_ref: (N, Cout, H+2, W+2) VMEM f32"""
    n, cin, h, w = x_ref.shape
    _, cout, ho, wo = o_ref.shape

    x = x_ref[...]  # one load of the whole (tiny) input block

    def chain(v1):
        # v2 = v1 - v1 ; v3 = clamp(v2, 0, 6) ; v4 = v1 * v3 ; v5 = v4 / 6
        v2 = v1 - v1
        v3 = jnp.clip(v2, 0.0, 6.0)
        return (v1 * v3) * (1.0 / 6.0)  # constant multiply instead of divide

    for co in range(cout):  # static unroll (cout == 3)
        b = b_ref[co]       # SMEM scalar
        # Border ring only sees the zero padding -> conv output there == bias.
        o_ref[:, co, :, :] = chain(jnp.zeros((n, ho, wo), jnp.float32) + b)
        # Interior: 1x1 conv == cin broadcast-FMAs on the VPU.
        acc = jnp.zeros((n, h, w), jnp.float32) + b
        for ci in range(cin):  # static unroll (cin == 3)
            acc = acc + w_ref[co, ci] * x[:, ci, :, :]
        o_ref[:, co, 1:1 + h, 1:1 + w] = chain(acc)


def conv1x1_pad_unary(x, weight, bias):
    """x: (N, Cin, H, W) f32, weight: (Cout, Cin) f32 (1x1 kernel squeezed), bias: (Cout,) f32.
    Returns (N, Cout, H+2, W+2) f32 (padding=1 with a 1x1 kernel grows spatial dims)."""
    n, cin, h, w = x.shape
    cout = weight.shape[0]
    ho, wo = h + 2, w + 2

    return pl.pallas_call(
        _conv1x1_pad_unary_kernel,
        out_shape=jax.ShapeDtypeStruct((n, cout, ho, wo), jnp.float32),
        grid=(1,),  # single block: whole problem fits trivially in VMEM
        in_specs=[
            pl.BlockSpec((n, cin, h, w), lambda i: (0, 0, 0, 0)),
            pl.BlockSpec(memory_space=pltpu.MemorySpace.SMEM),
            pl.BlockSpec(memory_space=pltpu.MemorySpace.SMEM),
        ],
        out_specs=pl.BlockSpec((n, cout, ho, wo), lambda i: (0, 0, 0, 0)),
    )(x, weight, bias)


def _reference(x, weight, bias):
    # pure-JAX reference of the same math (same layout as PyTorch: NCHW)
    xp = jnp.pad(x, ((0, 0), (0, 0), (1, 1), (1, 1)))
    v1 = jnp.einsum("oc,nchw->nohw", weight, xp) + bias[None, :, None, None]
    v2 = v1 - v1
    v3 = jnp.clip(v2, 0.0, 6.0)
    v4 = v1 * v3
    return v4 / 6.0


if __name__ == "__main__":
    key = jax.random.PRNGKey(0)
    kx, kw, kb = jax.random.split(key, 3)

    # Module shapes: Conv2d(3, 3, kernel_size=1, stride=1, padding=1)
    n, cin, h, w = 2, 3, 16, 16
    cout = 3

    x = jax.random.normal(kx, (n, cin, h, w), dtype=jnp.float32)
    bound = 1.0 / (cin ** 0.5)
    weight = jax.random.uniform(kw, (cout, cin), jnp.float32, -bound, bound)
    bias = jax.random.uniform(kb, (cout,), jnp.float32, -bound, bound)

    out = conv1x1_pad_unary(x, weight, bias)
    out = jax.block_until_ready(out)

    ref = _reference(x, weight, bias)
    assert out.shape == (n, cout, h + 2, w + 2), out.shape
    assert jnp.allclose(out, ref, atol=1e-5, rtol=1e-5)

    print("KERNEL_OK")
</pallas_src>

<mosaic_0001>
module attributes {stable_mosaic.version = 11 : i64} {
  func.func @_conv1x1_pad_unary_kernel(%arg0: i32, %arg1: memref<2x3x16x16xf32, #tpu.memory_space<vmem>>, %arg2: memref<3x3xf32, #tpu.memory_space<smem>>, %arg3: memref<3xf32, #tpu.memory_space<smem>>, %arg4: memref<2x3x18x18xf32, #tpu.memory_space<vmem>>) attributes {dimension_semantics = [#tpu.dimension_semantics<arbitrary>], iteration_bounds = array<i64: 1>, scalar_prefetch = 0 : i64, scratch_operands = 0 : i64, tpu.core_type = #tpu.core_type<tc>, window_params = [{pipeline_mode = #tpu.pipeline_mode<synchronous>, transform_indices = @transform_0, window_bounds = array<i64: 2, 3, 16, 16>}, {transform_indices = @transform_1, window_bounds = array<i64: 3, 3>}, {transform_indices = @transform_2, window_bounds = array<i64: 3>}, {pipeline_mode = #tpu.pipeline_mode<synchronous>, transform_indices = @transform_3, window_bounds = array<i64: 2, 3, 18, 18>}]} {
    %c0 = arith.constant 0 : index
    %c0_0 = arith.constant 0 : index
    %c0_1 = arith.constant 0 : index
    %c0_2 = arith.constant 0 : index
    %0 = vector.load %arg1[%c0, %c0_0, %c0_1, %c0_2] : memref<2x3x16x16xf32, #tpu.memory_space<vmem>>, vector<2x3x16x16xf32>
    %c0_3 = arith.constant 0 : index
    %1 = memref.load %arg3[%c0_3] : memref<3xf32, #tpu.memory_space<smem>>
    %cst = arith.constant 0.000000e+00 : f32
    %2 = vector.broadcast %cst : f32 to vector<2x18x18xf32>
    %3 = vector.broadcast %1 : f32 to vector<2x18x18xf32>
    %4 = arith.addf %2, %3 : vector<2x18x18xf32>
    %5 = arith.subf %4, %4 : vector<2x18x18xf32>
    %cst_4 = arith.constant 0.000000e+00 : f32
    %cst_5 = arith.constant 6.000000e+00 : f32
    %6 = vector.broadcast %cst_4 : f32 to vector<2x18x18xf32>
    %7 = arith.maximumf %6, %5 : vector<2x18x18xf32>
    %8 = vector.broadcast %cst_5 : f32 to vector<2x18x18xf32>
    %9 = arith.minimumf %8, %7 : vector<2x18x18xf32>
    %10 = arith.mulf %4, %9 : vector<2x18x18xf32>
    %cst_6 = arith.constant 0.166666672 : f32
    %11 = vector.broadcast %cst_6 : f32 to vector<2x18x18xf32>
    %12 = arith.mulf %10, %11 : vector<2x18x18xf32>
    %c0_7 = arith.constant 0 : index
    %c0_8 = arith.constant 0 : index
    %c0_9 = arith.constant 0 : index
    %c0_10 = arith.constant 0 : index
    %13 = vector.load %arg4[%c0_7, %c0_8, %c0_9, %c0_10] : memref<2x3x18x18xf32, #tpu.memory_space<vmem>>, vector<2x1x18x18xf32>
    %14 = vector.shape_cast %13 : vector<2x1x18x18xf32> to vector<2x18x18xf32>
    %15 = vector.shape_cast %12 : vector<2x18x18xf32> to vector<2x1x18x18xf32>
    tpu.vector_store %arg4[%c0_7, %c0_8, %c0_9, %c0_10], %15 {strides = array<i32>} : memref<2x3x18x18xf32, #tpu.memory_space<vmem>>, vector<2x1x18x18xf32>,
    %cst_11 = arith.constant 0.000000e+00 : f32
    %16 = vector.broadcast %cst_11 : f32 to vector<2x16x16xf32>
    %17 = vector.broadcast %1 : f32 to vector<2x16x16xf32>
    %18 = arith.addf %16, %17 : vector<2x16x16xf32>
    %c0_12 = arith.constant 0 : index
    %c0_13 = arith.constant 0 : index
    %19 = memref.load %arg2[%c0_12, %c0_13] : memref<3x3xf32, #tpu.memory_space<smem>>
    %20 = vector.extract_strided_slice %0 {offsets = [0, 0, 0, 0], sizes = [2, 1, 16, 16], strides = [1, 1, 1, 1]} : vector<2x3x16x16xf32> to vector<2x1x16x16xf32>
    %21 = vector.shape_cast %20 : vector<2x1x16x16xf32> to vector<2x16x16xf32>
    %22 = vector.broadcast %19 : f32 to vector<2x16x16xf32>
    %23 = arith.mulf %22, %21 : vector<2x16x16xf32>
    %24 = arith.addf %18, %23 : vector<2x16x16xf32>
    %c0_14 = arith.constant 0 : index
    %c1 = arith.constant 1 : index
    %25 = memref.load %arg2[%c0_14, %c1] : memref<3x3xf32, #tpu.memory_space<smem>>
    %26 = vector.extract_strided_slice %0 {offsets = [0, 1, 0, 0], sizes = [2, 1, 16, 16], strides = [1, 1, 1, 1]} : vector<2x3x16x16xf32> to vector<2x1x16x16xf32>
    %27 = vector.shape_cast %26 : vector<2x1x16x16xf32> to vector<2x16x16xf32>
    %28 = vector.broadcast %25 : f32 to vector<2x16x16xf32>
    %29 = arith.mulf %28, %27 : vector<2x16x16xf32>
    %30 = arith.addf %24, %29 : vector<2x16x16xf32>
    %c0_15 = arith.constant 0 : index
    %c2 = arith.constant 2 : index
    %31 = memref.load %arg2[%c0_15, %c2] : memref<3x3xf32, #tpu.memory_space<smem>>
    %32 = vector.extract_strided_slice %0 {offsets = [0, 2, 0, 0], sizes = [2, 1, 16, 16], strides = [1, 1, 1, 1]} : vector<2x3x16x16xf32> to vector<2x1x16x16xf32>
    %33 = vector.shape_cast %32 : vector<2x1x16x16xf32> to vector<2x16x16xf32>
    %34 = vector.broadcast %31 : f32 to vector<2x16x16xf32>
    %35 = arith.mulf %34, %33 : vector<2x16x16xf32>
    %36 = arith.addf %30, %35 : vector<2x16x16xf32>
    %37 = arith.subf %36, %36 : vector<2x16x16xf32>
    %cst_16 = arith.constant 0.000000e+00 : f32
    %cst_17 = arith.constant 6.000000e+00 : f32
    %38 = vector.broadcast %cst_16 : f32 to vector<2x16x16xf32>
    %39 = arith.maximumf %38, %37 : vector<2x16x16xf32>
    %40 = vector.broadcast %cst_17 : f32 to vector<2x16x16xf32>
    %41 = arith.minimumf %40, %39 : vector<2x16x16xf32>
    %42 = arith.mulf %36, %41 : vector<2x16x16xf32>
    %cst_18 = arith.constant 0.166666672 : f32
    %43 = vector.broadcast %cst_18 : f32 to vector<2x16x16xf32>
    %44 = arith.mulf %42, %43 : vector<2x16x16xf32>
    %c0_19 = arith.constant 0 : index
    %c0_20 = arith.constant 0 : index
    %c1_21 = arith.constant 1 : index
    %c1_22 = arith.constant 1 : index
    %45 = vector.load %arg4[%c0_19, %c0_20, %c1_21, %c1_22] : memref<2x3x18x18xf32, #tpu.memory_space<vmem>>, vector<2x1x16x16xf32>
    %46 = vector.shape_cast %45 : vector<2x1x16x16xf32> to vector<2x16x16xf32>
    %47 = vector.shape_cast %44 : vector<2x16x16xf32> to vector<2x1x16x16xf32>
    tpu.vector_store %arg4[%c0_19, %c0_20, %c1_21, %c1_22], %47 {strides = array<i32>} : memref<2x3x18x18xf32, #tpu.memory_space<vmem>>, vector<2x1x16x16xf32>,
    %c1_23 = arith.constant 1 : index
    %48 = memref.load %arg3[%c1_23] : memref<3xf32, #tpu.memory_space<smem>>
    %cst_24 = arith.constant 0.000000e+00 : f32
    %49 = vector.broadcast %cst_24 : f32 to vector<2x18x18xf32>
    %50 = vector.broadcast %48 : f32 to vector<2x18x18xf32>
    %51 = arith.addf %49, %50 : vector<2x18x18xf32>
    %52 = arith.subf %51, %51 : vector<2x18x18xf32>
    %cst_25 = arith.constant 0.000000e+00 : f32
    %cst_26 = arith.constant 6.000000e+00 : f32
    %53 = vector.broadcast %cst_25 : f32 to vector<2x18x18xf32>
    %54 = arith.maximumf %53, %52 : vector<2x18x18xf32>
    %55 = vector.broadcast %cst_26 : f32 to vector<2x18x18xf32>
    %56 = arith.minimumf %55, %54 : vector<2x18x18xf32>
    %57 = arith.mulf %51, %56 : vector<2x18x18xf32>
    %cst_27 = arith.constant 0.166666672 : f32
    %58 = vector.broadcast %cst_27 : f32 to vector<2x18x18xf32>
    %59 = arith.mulf %57, %58 : vector<2x18x18xf32>
    %c0_28 = arith.constant 0 : index
    %c1_29 = arith.constant 1 : index
    %c0_30 = arith.constant 0 : index
    %c0_31 = arith.constant 0 : index
    %60 = vector.load %arg4[%c0_28, %c1_29, %c0_30, %c0_31] : memref<2x3x18x18xf32, #tpu.memory_space<vmem>>, vector<2x1x18x18xf32>
    %61 = vector.shape_cast %60 : vector<2x1x18x18xf32> to vector<2x18x18xf32>
    %62 = vector.shape_cast %59 : vector<2x18x18xf32> to vector<2x1x18x18xf32>
    tpu.vector_store %arg4[%c0_28, %c1_29, %c0_30, %c0_31], %62 {strides = array<i32>} : memref<2x3x18x18xf32, #tpu.memory_space<vmem>>, vector<2x1x18x18xf32>,
    %cst_32 = arith.constant 0.000000e+00 : f32
    %63 = vector.broadcast %cst_32 : f32 to vector<2x16x16xf32>
    %64 = vector.broadcast %48 : f32 to vector<2x16x16xf32>
    %65 = arith.addf %63, %64 : vector<2x16x16xf32>
    %c1_33 = arith.constant 1 : index
    %c0_34 = arith.constant 0 : index
    %66 = memref.load %arg2[%c1_33, %c0_34] : memref<3x3xf32, #tpu.memory_space<smem>>
    %67 = vector.extract_strided_slice %0 {offsets = [0, 0, 0, 0], sizes = [2, 1, 16, 16], strides = [1, 1, 1, 1]} : vector<2x3x16x16xf32> to vector<2x1x16x16xf32>
    %68 = vector.shape_cast %67 : vector<2x1x16x16xf32> to vector<2x16x16xf32>
    %69 = vector.broadcast %66 : f32 to vector<2x16x16xf32>
    %70 = arith.mulf %69, %68 : vector<2x16x16xf32>
    %71 = arith.addf %65, %70 : vector<2x16x16xf32>
    %c1_35 = arith.constant 1 : index
    %c1_36 = arith.constant 1 : index
    %72 = memref.load %arg2[%c1_35, %c1_36] : memref<3x3xf32, #tpu.memory_space<smem>>
    %73 = vector.extract_strided_slice %0 {offsets = [0, 1, 0, 0], sizes = [2, 1, 16, 16], strides = [1, 1, 1, 1]} : vector<2x3x16x16xf32> to vector<2x1x16x16xf32>
    %74 = vector.shape_cast %73 : vector<2x1x16x16xf32> to vector<2x16x16xf32>
    %75 = vector.broadcast %72 : f32 to vector<2x16x16xf32>
    %76 = arith.mulf %75, %74 : vector<2x16x16xf32>
    %77 = arith.addf %71, %76 : vector<2x16x16xf32>
    %c1_37 = arith.constant 1 : index
    %c2_38 = arith.constant 2 : index
    %78 = memref.load %arg2[%c1_37, %c2_38] : memref<3x3xf32, #tpu.memory_space<smem>>
    %79 = vector.extract_strided_slice %0 {offsets = [0, 2, 0, 0], sizes = [2, 1, 16, 16], strides = [1, 1, 1, 1]} : vector<2x3x16x16xf32> to vector<2x1x16x16xf32>
    %80 = vector.shape_cast %79 : vector<2x1x16x16xf32> to vector<2x16x16xf32>
    %81 = vector.broadcast %78 : f32 to vector<2x16x16xf32>
    %82 = arith.mulf %81, %80 : vector<2x16x16xf32>
    %83 = arith.addf %77, %82 : vector<2x16x16xf32>
    %84 = arith.subf %83, %83 : vector<2x16x16xf32>
    %cst_39 = arith.constant 0.000000e+00 : f32
    %cst_40 = arith.constant 6.000000e+00 : f32
    %85 = vector.broadcast %cst_39 : f32 to vector<2x16x16xf32>
    %86 = arith.maximumf %85, %84 : vector<2x16x16xf32>
    %87 = vector.broadcast %cst_40 : f32 to vector<2x16x16xf32>
    %88 = arith.minimumf %87, %86 : vector<2x16x16xf32>
    %89 = arith.mulf %83, %88 : vector<2x16x16xf32>
    %cst_41 = arith.constant 0.166666672 : f32
    %90 = vector.broadcast %cst_41 : f32 to vector<2x16x16xf32>
    %91 = arith.mulf %89, %90 : vector<2x16x16xf32>
    %c0_42 = arith.constant 0 : index
    %c1_43 = arith.constant 1 : index
    %c1_44 = arith.constant 1 : index
    %c1_45 = arith.constant 1 : index
    %92 = vector.load %arg4[%c0_42, %c1_43, %c1_44, %c1_45] : memref<2x3x18x18xf32, #tpu.memory_space<vmem>>, vector<2x1x16x16xf32>
    %93 = vector.shape_cast %92 : vector<2x1x16x16xf32> to vector<2x16x16xf32>
    %94 = vector.shape_cast %91 : vector<2x16x16xf32> to vector<2x1x16x16xf32>
    tpu.vector_store %arg4[%c0_42, %c1_43, %c1_44, %c1_45], %94 {strides = array<i32>} : memref<2x3x18x18xf32, #tpu.memory_space<vmem>>, vector<2x1x16x16xf32>,
    %c2_46 = arith.constant 2 : index
    %95 = memref.load %arg3[%c2_46] : memref<3xf32, #tpu.memory_space<smem>>
    %cst_47 = arith.constant 0.000000e+00 : f32
    %96 = vector.broadcast %cst_47 : f32 to vector<2x18x18xf32>
    %97 = vector.broadcast %95 : f32 to vector<2x18x18xf32>
    %98 = arith.addf %96, %97 : vector<2x18x18xf32>
    %99 = arith.subf %98, %98 : vector<2x18x18xf32>
    %cst_48 = arith.constant 0.000000e+00 : f32
    %cst_49 = arith.constant 6.000000e+00 : f32
    %100 = vector.broadcast %cst_48 : f32 to vector<2x18x18xf32>
    %101 = arith.maximumf %100, %99 : vector<2x18x18xf32>
    %102 = vector.broadcast %cst_49 : f32 to vector<2x18x18xf32>
    %103 = arith.minimumf %102, %101 : vector<2x18x18xf32>
    %104 = arith.mulf %98, %103 : vector<2x18x18xf32>
    %cst_50 = arith.constant 0.166666672 : f32
    %105 = vector.broadcast %cst_50 : f32 to vector<2x18x18xf32>
    %106 = arith.mulf %104, %105 : vector<2x18x18xf32>
    %c0_51 = arith.constant 0 : index
    %c2_52 = arith.constant 2 : index
    %c0_53 = arith.constant 0 : index
    %c0_54 = arith.constant 0 : index
    %107 = vector.load %arg4[%c0_51, %c2_52, %c0_53, %c0_54] : memref<2x3x18x18xf32, #tpu.memory_space<vmem>>, vector<2x1x18x18xf32>
    %108 = vector.shape_cast %107 : vector<2x1x18x18xf32> to vector<2x18x18xf32>
    %109 = vector.shape_cast %106 : vector<2x18x18xf32> to vector<2x1x18x18xf32>
    tpu.vector_store %arg4[%c0_51, %c2_52, %c0_53, %c0_54], %109 {strides = array<i32>} : memref<2x3x18x18xf32, #tpu.memory_space<vmem>>, vector<2x1x18x18xf32>,
    %cst_55 = arith.constant 0.000000e+00 : f32
    %110 = vector.broadcast %cst_55 : f32 to vector<2x16x16xf32>
    %111 = vector.broadcast %95 : f32 to vector<2x16x16xf32>
    %112 = arith.addf %110, %111 : vector<2x16x16xf32>
    %c2_56 = arith.constant 2 : index
    %c0_57 = arith.constant 0 : index
    %113 = memref.load %arg2[%c2_56, %c0_57] : memref<3x3xf32, #tpu.memory_space<smem>>
    %114 = vector.extract_strided_slice %0 {offsets = [0, 0, 0, 0], sizes = [2, 1, 16, 16], strides = [1, 1, 1, 1]} : vector<2x3x16x16xf32> to vector<2x1x16x16xf32>
    %115 = vector.shape_cast %114 : vector<2x1x16x16xf32> to vector<2x16x16xf32>
    %116 = vector.broadcast %113 : f32 to vector<2x16x16xf32>
    %117 = arith.mulf %116, %115 : vector<2x16x16xf32>
    %118 = arith.addf %112, %117 : vector<2x16x16xf32>
    %c2_58 = arith.constant 2 : index
    %c1_59 = arith.constant 1 : index
    %119 = memref.load %arg2[%c2_58, %c1_59] : memref<3x3xf32, #tpu.memory_space<smem>>
    %120 = vector.extract_strided_slice %0 {offsets = [0, 1, 0, 0], sizes = [2, 1, 16, 16], strides = [1, 1, 1, 1]} : vector<2x3x16x16xf32> to vector<2x1x16x16xf32>
    %121 = vector.shape_cast %120 : vector<2x1x16x16xf32> to vector<2x16x16xf32>
    %122 = vector.broadcast %119 : f32 to vector<2x16x16xf32>
    %123 = arith.mulf %122, %121 : vector<2x16x16xf32>
    %124 = arith.addf %118, %123 : vector<2x16x16xf32>
    %c2_60 = arith.constant 2 : index
    %c2_61 = arith.constant 2 : index
    %125 = memref.load %arg2[%c2_60, %c2_61] : memref<3x3xf32, #tpu.memory_space<smem>>
    %126 = vector.extract_strided_slice %0 {offsets = [0, 2, 0, 0], sizes = [2, 1, 16, 16], strides = [1, 1, 1, 1]} : vector<2x3x16x16xf32> to vector<2x1x16x16xf32>
    %127 = vector.shape_cast %126 : vector<2x1x16x16xf32> to vector<2x16x16xf32>
    %128 = vector.broadcast %125 : f32 to vector<2x16x16xf32>
    %129 = arith.mulf %128, %127 : vector<2x16x16xf32>
    %130 = arith.addf %124, %129 : vector<2x16x16xf32>
    %131 = arith.subf %130, %130 : vector<2x16x16xf32>
    %cst_62 = arith.constant 0.000000e+00 : f32
    %cst_63 = arith.constant 6.000000e+00 : f32
    %132 = vector.broadcast %cst_62 : f32 to vector<2x16x16xf32>
    %133 = arith.maximumf %132, %131 : vector<2x16x16xf32>
    %134 = vector.broadcast %cst_63 : f32 to vector<2x16x16xf32>
    %135 = arith.minimumf %134, %133 : vector<2x16x16xf32>
    %136 = arith.mulf %130, %135 : vector<2x16x16xf32>
    %cst_64 = arith.constant 0.166666672 : f32
    %137 = vector.broadcast %cst_64 : f32 to vector<2x16x16xf32>
    %138 = arith.mulf %136, %137 : vector<2x16x16xf32>
    %c0_65 = arith.constant 0 : index
    %c2_66 = arith.constant 2 : index
    %c1_67 = arith.constant 1 : index
    %c1_68 = arith.constant 1 : index
    %139 = vector.load %arg4[%c0_65, %c2_66, %c1_67, %c1_68] : memref<2x3x18x18xf32, #tpu.memory_space<vmem>>, vector<2x1x16x16xf32>
    %140 = vector.shape_cast %139 : vector<2x1x16x16xf32> to vector<2x16x16xf32>
    %141 = vector.shape_cast %138 : vector<2x16x16xf32> to vector<2x1x16x16xf32>
    tpu.vector_store %arg4[%c0_65, %c2_66, %c1_67, %c1_68], %141 {strides = array<i32>} : memref<2x3x18x18xf32, #tpu.memory_space<vmem>>, vector<2x1x16x16xf32>,
    return
  }
  func.func @transform_0(%arg0: i32) -> (i32, i32, i32, i32) {
    %c0_i32 = arith.constant 0 : i32
    %c0_i32_0 = arith.constant 0 : i32
    %c0_i32_1 = arith.constant 0 : i32
    %c0_i32_2 = arith.constant 0 : i32
    %c0_i32_3 = arith.constant 0 : i32
    return %c0_i32, %c0_i32_0, %c0_i32_1, %c0_i32_2 : i32, i32, i32, i32
  }
  func.func @transform_1(%arg0: i32) -> (i32, i32) {
    %c0_i32 = arith.constant 0 : i32
    %c0_i32_0 = arith.constant 0 : i32
    %c0_i32_1 = arith.constant 0 : i32
    return %c0_i32, %c0_i32_0 : i32, i32
  }
  func.func @transform_2(%arg0: i32) -> i32 {
    %c0_i32 = arith.constant 0 : i32
    %c0_i32_0 = arith.constant 0 : i32
    return %c0_i32 : i32
  }
  func.func @transform_3(%arg0: i32) -> (i32, i32, i32, i32) {
    %c0_i32 = arith.constant 0 : i32
    %c0_i32_0 = arith.constant 0 : i32
    %c0_i32_1 = arith.constant 0 : i32
    %c0_i32_2 = arith.constant 0 : i32
    %c0_i32_3 = arith.constant 0 : i32
    return %c0_i32, %c0_i32_0, %c0_i32_1, %c0_i32_2 : i32, i32, i32, i32
  }
}

</mosaic_0001>

<llo_original>
// kernel: tpu_custom_call.1
$region0: #{tpu_custom_call.1}
  #allocation0 [shape = 'u32[]', space=smem, size = 0x4, offset = 0x4, fixed_abs, tag = 'smem constant byte address 0x4 - core index']
  #allocation1 [shape = 'u32[144,128]{1,0:T(1,128)}', space=vmem, size = 0x12000, scoped, tag = 'internal scratch']
  %s0 = inlined_call_operand.hbm [shape: f32[2,3,16,16], index: 0, kind: input, shape index: {}]
  %s1 = inlined_call_operand.hbm [shape: f32[3,3], index: 1, kind: input, shape index: {}]
  %s2 = inlined_call_operand.vmem [shape: f32[3], index: 2, kind: input, shape index: {}]
  %s3 = inlined_call_operand.vmem [shape: f32[2,3,18,18], index: 3, kind: output, shape index: {}]
  %s4 = sld [smem:[#allocation0]]
  $region34: #{tpu_custom_call.1} parent=0
    _
  %s6 = ssub.s32 1, %s4
  %s7 = scalar_select 0, %s6, %s4
  $region1: #{tpu_custom_call.1} parent=0
    #allocation2 [shape = 'u8[49152]{0}', space=vmem, size = 0xc000, scoped, tag = 'input window, operand 0, single buffered']
    #allocation3 [shape = 's32[1]{0}', space=sflag, size = 0x4, scoped, tag = 'scoped memory for tpu_custom_call.1']
    #allocation4 [shape = 's32[1]{0}', space=sflag, size = 0x4, scoped, tag = 'scoped memory for tpu_custom_call.1']
    #allocation5 [shape = 's32[1]{0}', space=sflag, size = 0x4, scoped, tag = 'scoped memory for tpu_custom_call.1']
    #allocation6 [shape = 'u8[2048]{0}', space=smem, size = 0x800, scoped, tag = 'input window, operand 1, single buffered']
    #allocation7 [shape = 'u8[512]{0}', space=smem, size = 0x200, scoped, tag = 'input window, operand 2, single buffered']
    %8 = vsyncpa [#allocation3], 0
    %9 = vsyncpa [#allocation4], 0
    %10 = vsyncpa [#allocation5], 0
    // Predicated region
    $region2: #{tpu_custom_call.1} parent=1 // pred_check
      _
    $region3: #{tpu_custom_call.1} parent=1 // pred_check_branch
      %12 = sbr.rel (0) target = $region5
    $region4: #{tpu_custom_call.1} parent=1 // pred_region
      %s14 = ssub.s32 1536, 1536
      %15 = vsyncadd [#allocation3], %s14
      %s16 = sshll.u32 [#allocation2], 4
      %s17 = int_to_ptr.vmem [resolvable:$true] %s16
      %22 = dma.hbm_to_vmem [thread:$0]  %s0, 1536, %s17, [#allocation3], 128, 128, 8
    $region5: #{tpu_custom_call.1} parent=1 // pred_fallthru
      _
    // Predicated region
    $region6: #{tpu_custom_call.1} parent=1 // pred_check
      _
    $region7: #{tpu_custom_call.1} parent=1 // pred_check_branch
      %24 = sbr.rel (0) target = $region9
    $region8: #{tpu_custom_call.1} parent=1 // pred_region
      %s26 = ssub.s32 64, 64
      %27 = vsyncadd [#allocation4], %s26
      %30 = dma.hbm_to_smem %s1, 64, [#allocation6], [#allocation4]
    $region9: #{tpu_custom_call.1} parent=1 // pred_fallthru
      _
    // Predicated region
    $region10: #{tpu_custom_call.1} parent=1 // pred_check
      _
    $region11: #{tpu_custom_call.1} parent=1 // pred_check_branch
      %32 = sbr.rel (0) target = $region13
    $region12: #{tpu_custom_call.1} parent=1 // pred_region
      %s34 = ssub.s32 16, 16
      %35 = vsyncadd [#allocation5], %s34
      %s37 = sshll.u32 %s2, 4
      %s38 = int_to_ptr.vmem [resolvable:$true] %s37
      %40 = dma.vmem_to_smem %s38, 16, [#allocation7], [#allocation5]
    $region13: #{tpu_custom_call.1} parent=1 // pred_fallthru
      _
    // Predicated region
    $region14: #{tpu_custom_call.1} parent=1 // pred_check
      _
    $region15: #{tpu_custom_call.1} parent=1 // pred_check_branch
      %42 = sbr.rel (0) target = $region17
    $region16: #{tpu_custom_call.1} parent=1 // pred_region
      %43 = dma.done [#allocation3], 1536
    $region17: #{tpu_custom_call.1} parent=1 // pred_fallthru
      _
    // Predicated region
    $region18: #{tpu_custom_call.1} parent=1 // pred_check
      _
    $region19: #{tpu_custom_call.1} parent=1 // pred_check_branch
      %45 = sbr.rel (0) target = $region21
    $region20: #{tpu_custom_call.1} parent=1 // pred_region
      %46 = dma.done [#allocation4], 64
    $region21: #{tpu_custom_call.1} parent=1 // pred_fallthru
      _
    // Predicated region
    $region22: #{tpu_custom_call.1} parent=1 // pred_check
      _
    $region23: #{tpu_custom_call.1} parent=1 // pred_check_branch
      %48 = sbr.rel (0) target = $region25
    $region24: #{tpu_custom_call.1} parent=1 // pred_region
      %49 = dma.done [#allocation5], 16
    $region25: #{tpu_custom_call.1} parent=1 // pred_fallthru
      _
    %50 = sfence
    %v51 = vld [vmem:[#allocation2] sm:$0xff]
    %v52 = vld [vmem:[#allocation2 + $0x8] sm:$0xff]
    %v53 = vld [vmem:[#allocation2 + $0x10] sm:$0xff]
    %v54 = vld [vmem:[#allocation2 + $0x18] sm:$0xff]
    %v55 = vld [vmem:[#allocation2 + $0x20] sm:$0xff]
    %v56 = vld [vmem:[#allocation2 + $0x28] sm:$0xff]
    %v57 = vld [vmem:[#allocation2 + $0x30] sm:$0xff]
    %v58 = vld [vmem:[#allocation2 + $0x38] sm:$0xff]
    %v59 = vld [vmem:[#allocation2 + $0x40] sm:$0xff]
    %v60 = vld [vmem:[#allocation2 + $0x48] sm:$0xff]
    %v61 = vld [vmem:[#allocation2 + $0x50] sm:$0xff]
    %v62 = vld [vmem:[#allocation2 + $0x58] sm:$0xff]
    %s63 = sld [smem:[#allocation7]]
    %v64 = vstv %s63
    %v65 = vadd.f32 %v64, 0.0
    %v66 = vsub.f32 %v65, %v65
    %v67 = vmax.f32 %v66, 0.0
    %v68 = vmin.f32 %v67, 6.0
    %v69 = vmul.f32 %v65, %v68
    %v70 = vmul.f32 %v69, 0.16666667
    %vm71 = vcmask 146432
    %72 = vst.msk [vmem:[%s3] sm:$0xff] %vm71, %v70
    %73 = vst.msk [vmem:[%s3 + $0x8] sm:$0xff] %vm71, %v70
    %vm74 = vcmask 140288
    %75 = vst.msk [vmem:[%s3 + $0x10] sm:$0x3] %vm74, %v70
    %76 = vst.msk [vmem:[%s3 + $0x48] sm:$0xff] %vm71, %v70
    %77 = vst.msk [vmem:[%s3 + $0x50] sm:$0xff] %vm71, %v70
    %78 = vst.msk [vmem:[%s3 + $0x58] sm:$0x3] %vm74, %v70
    %s79 = sld [smem:[#allocation6]]
    %v80 = vstv %s79
    %v81 = vmul.f32 %v80, %v51
    %v82 = vmul.f32 %v80, %v52
    %v83 = vmul.f32 %v80, %v57
    %v84 = vmul.f32 %v80, %v58
    %v85 = vadd.f32 %v65, %v81
    %v86 = vadd.f32 %v65, %v82
    %v87 = vadd.f32 %v65, %v83
    %v88 = vadd.f32 %v65, %v84
    %s89 = sld [smem:[#allocation6 + $0x1]]
    %v90 = vstv %s89
    %v91 = vmul.f32 %v90, %v53
    %v92 = vmul.f32 %v90, %v54
    %v93 = vmul.f32 %v90, %v59
    %v94 = vmul.f32 %v90, %v60
    %v95 = vadd.f32 %v85, %v91
    %v96 = vadd.f32 %v86, %v92
    %v97 = vadd.f32 %v87, %v93
    %v98 = vadd.f32 %v88, %v94
    %s99 = sld [smem:[#allocation6 + $0x2]]
    %v100 = vstv %s99
    %v101 = vmul.f32 %v100, %v55
    %v102 = vmul.f32 %v100, %v56
    %v103 = vmul.f32 %v100, %v61
    %v104 = vmul.f32 %v100, %v62
    %v105 = vadd.f32 %v95, %v101
    %v106 = vadd.f32 %v96, %v102
    %v107 = vadd.f32 %v97, %v103
    %v108 = vadd.f32 %v98, %v104
    %v109 = vsub.f32 %v105, %v105
    %v110 = vsub.f32 %v106, %v106
    %v111 = vsub.f32 %v107, %v107
    %v112 = vsub.f32 %v108, %v108
    %v113 = vmax.f32 %v109, 0.0
    %v114 = vmax.f32 %v110, 0.0
    %v115 = vmax.f32 %v111, 0.0
    %v116 = vmax.f32 %v112, 0.0
    %v117 = vmin.f32 %v113, 6.0
    %v118 = vmin.f32 %v114, 6.0
    %v119 = vmin.f32 %v115, 6.0
    %v120 = vmin.f32 %v116, 6.0
    %v121 = vmul.f32 %v105, %v117
    %v122 = vmul.f32 %v106, %v118
    %v123 = vmul.f32 %v107, %v119
    %v124 = vmul.f32 %v108, %v120
    %v125 = vmul.f32 %v121, 0.16666667
    %v126 = vmul.f32 %v122, 0.16666667
    %v127 = vmul.f32 %v123, 0.16666667
    %v128 = vmul.f32 %v124, 0.16666667
    %133 = vrot.lane.b32.xlu0 %v125, 1
    %v134 = vpop.permute.xlu0 %133
    %135 = vrot.lane.b32.xlu0 %v126, 1
    %v136 = vpop.permute.xlu0 %135
    %137 = vrot.lane.b32.xlu0 %v127, 1
    %v138 = vpop.permute.xlu0 %137
    %139 = vrot.lane.b32.xlu0 %v128, 1
    %v140 = vpop.permute.xlu0 %139
    %vm145 = vcmask 138248
    %146 = vst.msk [vmem:[%s3 + $0x1] sm:$0xff] %vm145, %v134
    %147 = vst.msk [vmem:[%s3 + $0x9] sm:$0xff] %vm145, %v136
    %148 = vst.msk [vmem:[%s3 + $0x49] sm:$0xff] %vm145, %v138
    %149 = vst.msk [vmem:[%s3 + $0x51] sm:$0xff] %vm145, %v140
    %s150 = sld [smem:[#allocation7 + $0x1]]
    %v151 = vstv %s150
    %v152 = vadd.f32 %v151, 0.0
    %v153 = vsub.f32 %v152, %v152
    %v154 = vmax.f32 %v153, 0.0
    %v155 = vmin.f32 %v154, 6.0
    %v156 = vmul.f32 %v152, %v155
    %v157 = vmul.f32 %v156, 0.16666667
    %s158 = scalar_lea.vmem %s3, 24
    %159 = vst.msk [vmem:[%s158] sm:$0xff] %vm71, %v157
    %160 = vst.msk [vmem:[%s158 + $0x8] sm:$0xff] %vm71, %v157
    %161 = vst.msk [vmem:[%s158 + $0x10] sm:$0x3] %vm74, %v157
    %162 = vst.msk [vmem:[%s158 + $0x48] sm:$0xff] %vm71, %v157
    %163 = vst.msk [vmem:[%s158 + $0x50] sm:$0xff] %vm71, %v157
    %164 = vst.msk [vmem:[%s158 + $0x58] sm:$0x3] %vm74, %v157
    %s165 = sld [smem:[#allocation6 + $0x80]]
    %v166 = vstv %s165
    %v167 = vmul.f32 %v166, %v51
    %v168 = vmul.f32 %v166, %v52
    %v169 = vmul.f32 %v166, %v57
    %v170 = vmul.f32 %v166, %v58
    %v171 = vadd.f32 %v152, %v167
    %v172 = vadd.f32 %v152, %v168
    %v173 = vadd.f32 %v152, %v169
    %v174 = vadd.f32 %v152, %v170
    %s175 = sld [smem:[#allocation6 + $0x81]]
    %v176 = vstv %s175
    %v177 = vmul.f32 %v176, %v53
    %v178 = vmul.f32 %v176, %v54
    %v179 = vmul.f32 %v176, %v59
    %v180 = vmul.f32 %v176, %v60
    %v181 = vadd.f32 %v171, %v177
    %v182 = vadd.f32 %v172, %v178
    %v183 = vadd.f32 %v173, %v179
    %v184 = vadd.f32 %v174, %v180
    %s185 = sld [smem:[#allocation6 + $0x82]]
    %v186 = vstv %s185
    %v187 = vmul.f32 %v186, %v55
    %v188 = vmul.f32 %v186, %v56
    %v189 = vmul.f32 %v186, %v61
    %v190 = vmul.f32 %v186, %v62
    %v191 = vadd.f32 %v181, %v187
    %v192 = vadd.f32 %v182, %v188
    %v193 = vadd.f32 %v183, %v189
    %v194 = vadd.f32 %v184, %v190
    %v195 = vsub.f32 %v191, %v191
    %v196 = vsub.f32 %v192, %v192
    %v197 = vsub.f32 %v193, %v193
    %v198 = vsub.f32 %v194, %v194
    %v199 = vmax.f32 %v195, 0.0
    %v200 = vmax.f32 %v196, 0.0
    %v201 = vmax.f32 %v197, 0.0
    %v202 = vmax.f32 %v198, 0.0
    %v203 = vmin.f32 %v199, 6.0
    %v204 = vmin.f32 %v200, 6.0
    %v205 = vmin.f32 %v201, 6.0
    %v206 = vmin.f32 %v202, 6.0
    %v207 = vmul.f32 %v191, %v203
    %v208 = vmul.f32 %v192, %v204
    %v209 = vmul.f32 %v193, %v205
    %v210 = vmul.f32 %v194, %v206
    %v211 = vmul.f32 %v207, 0.16666667
    %v212 = vmul.f32 %v208, 0.16666667
    %v213 = vmul.f32 %v209, 0.16666667
    %v214 = vmul.f32 %v210, 0.16666667
    %219 = vrot.lane.b32.xlu0 %v211, 1
    %v220 = vpop.permute.xlu0 %219
    %221 = vrot.lane.b32.xlu0 %v212, 1
    %v222 = vpop.permute.xlu0 %221
    %223 = vrot.lane.b32.xlu0 %v213, 1
    %v224 = vpop.permute.xlu0 %223
    %225 = vrot.lane.b32.xlu0 %v214, 1
    %v226 = vpop.permute.xlu0 %225
    %231 = vst.msk [vmem:[%s158 + $0x1] sm:$0xff] %vm145, %v220
    %232 = vst.msk [vmem:[%s158 + $0x9] sm:$0xff] %vm145, %v222
    %233 = vst.msk [vmem:[%s158 + $0x49] sm:$0xff] %vm145, %v224
    %234 = vst.msk [vmem:[%s158 + $0x51] sm:$0xff] %vm145, %v226
    %s235 = sld [smem:[#allocation7 + $0x2]]
    %v236 = vstv %s235
    %v237 = vadd.f32 %v236, 0.0
    %v238 = vsub.f32 %v237, %v237
    %v239 = vmax.f32 %v238, 0.0
    %v240 = vmin.f32 %v239, 6.0
    %v241 = vmul.f32 %v237, %v240
    %v242 = vmul.f32 %v241, 0.16666667
    %s243 = scalar_lea.vmem %s3, 48
    %244 = vst.msk [vmem:[%s243] sm:$0xff] %vm71, %v242
    %245 = vst.msk [vmem:[%s243 + $0x8] sm:$0xff] %vm71, %v242
    %246 = vst.msk [vmem:[%s243 + $0x10] sm:$0x3] %vm74, %v242
    %247 = vst.msk [vmem:[%s243 + $0x48] sm:$0xff] %vm71, %v242
    %248 = vst.msk [vmem:[%s243 + $0x50] sm:$0xff] %vm71, %v242
    %249 = vst.msk [vmem:[%s243 + $0x58] sm:$0x3] %vm74, %v242
    %s250 = sld [smem:[#allocation6 + $0x100]]
    %v251 = vstv %s250
    %v252 = vmul.f32 %v251, %v51
    %v253 = vmul.f32 %v251, %v52
    %v254 = vmul.f32 %v251, %v57
    %v255 = vmul.f32 %v251, %v58
    %v256 = vadd.f32 %v237, %v252
    %v257 = vadd.f32 %v237, %v253
    %v258 = vadd.f32 %v237, %v254
    %v259 = vadd.f32 %v237, %v255
    %s260 = sld [smem:[#allocation6 + $0x101]]
    %v261 = vstv %s260
    %v262 = vmul.f32 %v261, %v53
    %v263 = vmul.f32 %v261, %v54
    %v264 = vmul.f32 %v261, %v59
    %v265 = vmul.f32 %v261, %v60
    %v266 = vadd.f32 %v256, %v262
    %v267 = vadd.f32 %v257, %v263
    %v268 = vadd.f32 %v258, %v264
    %v269 = vadd.f32 %v259, %v265
    %s270 = sld [smem:[#allocation6 + $0x102]]
    %v271 = vstv %s270
    %v272 = vmul.f32 %v271, %v55
    %v273 = vmul.f32 %v271, %v56
    %v274 = vmul.f32 %v271, %v61
    %v275 = vmul.f32 %v271, %v62
    %v276 = vadd.f32 %v266, %v272
    %v277 = vadd.f32 %v267, %v273
    %v278 = vadd.f32 %v268, %v274
    %v279 = vadd.f32 %v269, %v275
    %v280 = vsub.f32 %v276, %v276
    %v281 = vsub.f32 %v277, %v277
    %v282 = vsub.f32 %v278, %v278
    %v283 = vsub.f32 %v279, %v279
    %v284 = vmax.f32 %v280, 0.0
    %v285 = vmax.f32 %v281, 0.0
    %v286 = vmax.f32 %v282, 0.0
    %v287 = vmax.f32 %v283, 0.0
    %v288 = vmin.f32 %v284, 6.0
    %v289 = vmin.f32 %v285, 6.0
    %v290 = vmin.f32 %v286, 6.0
    %v291 = vmin.f32 %v287, 6.0
    %v292 = vmul.f32 %v276, %v288
    %v293 = vmul.f32 %v277, %v289
    %v294 = vmul.f32 %v278, %v290
    %v295 = vmul.f32 %v279, %v291
    %v296 = vmul.f32 %v292, 0.16666667
    %v297 = vmul.f32 %v293, 0.16666667
    %v298 = vmul.f32 %v294, 0.16666667
    %v299 = vmul.f32 %v295, 0.16666667
    %304 = vrot.lane.b32.xlu0 %v296, 1
    %v305 = vpop.permute.xlu0 %304
    %306 = vrot.lane.b32.xlu0 %v297, 1
    %v307 = vpop.permute.xlu0 %306
    %308 = vrot.lane.b32.xlu0 %v298, 1
    %v309 = vpop.permute.xlu0 %308
    %310 = vrot.lane.b32.xlu0 %v299, 1
    %v311 = vpop.permute.xlu0 %310
    %316 = vst.msk [vmem:[%s243 + $0x1] sm:$0xff] %vm145, %v305
    %317 = vst.msk [vmem:[%s243 + $0x9] sm:$0xff] %vm145, %v307
    %318 = vst.msk [vmem:[%s243 + $0x49] sm:$0xff] %vm145, %v309
    %319 = vst.msk [vmem:[%s243 + $0x51] sm:$0xff] %vm145, %v311
    // Predicated region
    $region26: #{tpu_custom_call.1} parent=1 // pred_check
      _
    $region27: #{tpu_custom_call.1} parent=1 // pred_check_branch
      %321 = sbr.rel (0) target = $region29
    $region28: #{tpu_custom_call.1} parent=1 // pred_region
      _
    $region29: #{tpu_custom_call.1} parent=1 // pred_fallthru
      _
    // Predicated region
    $region30: #{tpu_custom_call.1} parent=1 // pred_check
      _
    $region31: #{tpu_custom_call.1} parent=1 // pred_check_branch
      %323 = sbr.rel (0) target = $region33
    $region32: #{tpu_custom_call.1} parent=1 // pred_region
      _
    $region33: #{tpu_custom_call.1} parent=1 // pred_fallthru
      _
    %324 = vsyncpa [#allocation3], 1
    %325 = vsyncpa [#allocation4], 1
    %326 = vsyncpa [#allocation5], 1

</llo_original>
